<compile_context>
chip_gen: v5e
topology: v5e:2x2
jax: 0.10.0
libtpu: 0.0.40
codegen_flags: <defaults>
</compile_context>

<pallas_src>
import functools

import jax
import jax.numpy as jnp
import numpy as np
from jax import lax
from jax.experimental import pallas as pl
from jax.experimental.pallas import tpu as pltpu


# Haar synthesis sign matrix: rows = output phases (a, b) in order
# (0,0), (0,1), (1,0), (1,1); columns = subbands (LL, LH, HL, HH).
_HAAR_S = np.array([[1.0,  1.0,  1.0,  1.0],
                    [1.0,  1.0, -1.0, -1.0],
                    [1.0, -1.0,  1.0, -1.0],
                    [1.0, -1.0, -1.0,  1.0]], dtype=np.float32)


def _hw_upsample_kernel(x_ref, w_ref, b_ref, o_ref, *, f32_highest):
    """Fused inverse-Haar + 1x1 conv for one channels-major slab of pixels.

    x_ref: (1, 4c, T)    input subbands, pixels on the lane axis
    w_ref: (4*oc, 4c)    fused weight  0.5 * kron(S, W), in x.dtype
    b_ref: (4*oc, 1)     f32 bias tiled over the 4 output phases
    o_ref: (1, 4*oc, T)  rows ordered (phase_h, phase_w, out_channel), lane-dense
    """
    xb = x_ref[0]                                              # (4c, T)
    precision = lax.Precision.HIGHEST if f32_highest else None
    acc = jnp.dot(w_ref[...], xb,
                  preferred_element_type=jnp.float32,
                  precision=precision)                         # (4*oc, T) f32
    o_ref[0] = (acc + b_ref[...]).astype(o_ref.dtype)


def _round_up(x, m):
    return (x + m - 1) // m * m


def _pick_tile(hw, n_batch, max_tile):
    """Pick a lane tile. Returns (tile, n_tiles, hw_padded)."""
    if hw % 128 == 0:
        q = hw // 128
        n_tiles = max(-(-hw // max_tile), 1)
        if n_batch * n_tiles < 2:                 # keep >= 2 grid steps for v7x megacore
            n_tiles = min(2, q)
        while q % n_tiles:                        # divisor of hw/128 -> no padding at all
            n_tiles += 1
        return hw // n_tiles, n_tiles, hw
    # Rare fallback (H*W not a multiple of 128): pad once to a multiple of 128.
    tile = min(max_tile, _round_up(hw, 128))
    hw_pad = _round_up(hw, tile)
    return tile, hw_pad // tile, hw_pad


@jax.jit
def hw_upsampling(x, weight, bias):
    """x: (N, 4*c, H, W) NCHW.  weight: (OC, c, 1, 1).  bias: (OC,).

    Returns (N, OC, 2H, 2W) in x.dtype, matching HWUpsampling.forward.
    Production path: pass x in bfloat16 (f32 accumulation is kept inside the kernel).
    """
    N, C4, H, W = x.shape
    assert C4 % 4 == 0, "in_channel must be divisible by 4"
    c = C4 // 4
    oc = weight.shape[0]
    HW = H * W
    itemsize = jnp.dtype(x.dtype).itemsize

    # Fold Haar signs + 0.5 scale + 1x1 conv into a single (4*oc, 4c) weight.
    # (Note: 4c / 4oc are padded internally by Mosaic to the sublane tiling; no explicit
    #  channel padding is required because the blocks span the full channel dims.)
    w2d = weight.reshape(oc, c).astype(jnp.float32)
    w4 = (0.5 * jnp.kron(jnp.asarray(_HAAR_S), w2d)).astype(x.dtype)   # (4*oc, 4*c)
    b4 = jnp.tile(bias.astype(jnp.float32), 4).reshape(4 * oc, 1)      # (4*oc, 1)

    # NCHW -> (N, 4c, H*W): pure reshape, no data movement, channels already major.
    xf = x.reshape(N, C4, HW)

    # Derive the lane tile from the double-buffered working set and real VMEM capacity.
    try:
        vmem_cap = int(pltpu.get_tpu_info().vmem_capacity_bytes)
    except Exception:  # pragma: no cover - conservative default (v7x-sized)
        vmem_cap = 64 * 1024 * 1024
    lane_bytes = 2 * (C4 + 4 * oc) * itemsize          # 2x for double-buffered in+out blocks
    budget = max(vmem_cap // 4, 8 * 1024 * 1024)
    max_tile = min(32768, budget // lane_bytes)
    max_tile = max(128, (max_tile // 128) * 128)

    tile_hw, n_tiles, hw_pad = _pick_tile(HW, N, max_tile)
    if hw_pad != HW:
        xf = jnp.pad(xf, ((0, 0), (0, 0), (0, hw_pad - HW)))

    est_vmem = lane_bytes * tile_hw + 4 * oc * C4 * itemsize + 4 * oc * 4 + (1 << 20)
    vmem_limit = int(max(32 * 1024 * 1024, min(int(0.7 * vmem_cap), 2 * est_vmem)))

    grid = (N, n_tiles)
    kernel = functools.partial(_hw_upsample_kernel,
                               f32_highest=(x.dtype == jnp.float32))

    yf = pl.pallas_call(
        kernel,
        grid=grid,
        in_specs=[pl.BlockSpec((1, C4, tile_hw), lambda n, i: (n, 0, i)),
                  pl.BlockSpec((4 * oc, 4 * c), lambda n, i: (0, 0)),
                  pl.BlockSpec((4 * oc, 1), lambda n, i: (0, 0))],
        out_specs=pl.BlockSpec((1, 4 * oc, tile_hw), lambda n, i: (n, 0, i)),
        out_shape=jax.ShapeDtypeStruct((N, 4 * oc, hw_pad), x.dtype),
        compiler_params=pltpu.CompilerParams(
            dimension_semantics=("parallel", "parallel"),
            vmem_limit_bytes=vmem_limit),
    )(xf, w4, b4)

    # Rows of yf are ordered (phase_h, phase_w, o); one transpose interleaves the four output
    # phases back into NCHW.  (See header: in-kernel fusion of this step is a known TODO.)
    if hw_pad != HW:
        yf = yf[:, :, :HW]
    yf = yf.reshape(N, 2, 2, oc, H, W)
    y = jnp.transpose(yf, (0, 3, 4, 1, 5, 2)).reshape(N, oc, 2 * H, 2 * W)
    return y


def _reference(x, weight, bias):
    """Pure-JAX f32 reference of HWUpsampling.forward for verification."""
    N, C4, H, W = x.shape
    c = C4 // 4
    oc = weight.shape[0]
    ll = x[:, :c]
    lh = x[:, c:2 * c]
    hl = x[:, 2 * c:3 * c]
    hh = x[:, 3 * c:]
    rec = jnp.zeros((N, c, 2 * H, 2 * W), x.dtype)
    rec = rec.at[:, :, 0::2, 0::2].set(0.5 * (ll + lh + hl + hh))
    rec = rec.at[:, :, 0::2, 1::2].set(0.5 * (ll + lh - hl - hh))
    rec = rec.at[:, :, 1::2, 0::2].set(0.5 * (ll - lh + hl - hh))
    rec = rec.at[:, :, 1::2, 1::2].set(0.5 * (ll - lh - hl + hh))
    w = weight.reshape(oc, c)
    out = jnp.einsum("oc,nchw->nohw", w, rec,
                     precision=lax.Precision.HIGHEST) + bias.reshape(1, oc, 1, 1)
    return out


if __name__ == "__main__":
    key = jax.random.PRNGKey(0)
    k_x, k_w, k_b = jax.random.split(key, 3)

    # Small shapes consistent with the module: in_channel = 16 -> c = 4 lowpass channels,
    # out_channel = 8, spatial 16x16 -> output spatial 32x32.
    N, in_channel, H, W = 2, 16, 16, 16
    out_channel = 8
    c = in_channel // 4

    x = jax.random.normal(k_x, (N, in_channel, H, W), dtype=jnp.float32)

    # Deterministic Conv2d(in_channel//4, out_channel, 1) params (PyTorch-style fan-in bound).
    fan_in = c * 1 * 1
    bound = 1.0 / np.sqrt(fan_in)
    weight = jax.random.uniform(k_w, (out_channel, c, 1, 1), jnp.float32,
                                minval=-bound, maxval=bound)
    bias = jax.random.uniform(k_b, (out_channel,), jnp.float32,
                              minval=-bound, maxval=bound)

    y_ref = jax.block_until_ready(_reference(x, weight, bias))

    # 1) f32 path: exact-semantics check (kernel uses HIGHEST precision only here).
    y32 = jax.block_until_ready(hw_upsampling(x, weight, bias))
    assert y32.shape == (N, out_channel, 2 * H, 2 * W), y32.shape
    np.testing.assert_allclose(np.asarray(y32), np.asarray(y_ref), rtol=1e-5, atol=1e-5)

    # 2) bf16 production path (perf-review item 1): bf16 activations, f32 accumulation.
    y16 = jax.block_until_ready(hw_upsampling(x.astype(jnp.bfloat16), weight, bias))
    assert y16.shape == (N, out_channel, 2 * H, 2 * W), y16.shape
    np.testing.assert_allclose(np.asarray(y16.astype(jnp.float32)), np.asarray(y_ref),
                               rtol=5e-2, atol=5e-2)

    print("KERNEL_OK")
</pallas_src>

<mosaic_0001>
module attributes {stable_mosaic.version = 11 : i64} {
  func.func @_hw_upsample_kernel(%arg0: i32, %arg1: i32, %arg2: memref<1x16x256xf32, #tpu.memory_space<vmem>>, %arg3: memref<32x16xf32, #tpu.memory_space<vmem>>, %arg4: memref<32x1xf32, #tpu.memory_space<vmem>>, %arg5: memref<1x32x256xf32, #tpu.memory_space<vmem>>) attributes {dimension_semantics = [#tpu.dimension_semantics<parallel>, #tpu.dimension_semantics<parallel>], iteration_bounds = array<i64: 2, 1>, scalar_prefetch = 0 : i64, scratch_operands = 0 : i64, tpu.core_type = #tpu.core_type<tc>, window_params = [{transform_indices = @transform_0, window_bounds = array<i64: 1, 16, 256>}, {pipeline_mode = #tpu.pipeline_mode<synchronous>, transform_indices = @transform_1, window_bounds = array<i64: 32, 16>}, {pipeline_mode = #tpu.pipeline_mode<synchronous>, transform_indices = @transform_2, window_bounds = array<i64: 32, 1>}, {transform_indices = @transform_3, window_bounds = array<i64: 1, 32, 256>}]} {
    %c0 = arith.constant 0 : index
    %c0_0 = arith.constant 0 : index
    %c0_1 = arith.constant 0 : index
    %0 = vector.load %arg2[%c0, %c0_0, %c0_1] : memref<1x16x256xf32, #tpu.memory_space<vmem>>, vector<1x16x256xf32>
    %1 = vector.shape_cast %0 : vector<1x16x256xf32> to vector<16x256xf32>
    %c0_2 = arith.constant 0 : index
    %c0_3 = arith.constant 0 : index
    %2 = vector.load %arg3[%c0_2, %c0_3] : memref<32x16xf32, #tpu.memory_space<vmem>>, vector<32x16xf32>
    %cst = arith.constant dense<0.000000e+00> : vector<32x256xf32>
    %3 = tpu.matmul %2, %1, %cst {dimension_numbers = #tpu.dot_dimension_numbers<[1], [0], [0], [1], [0, 0, 1, 1], [], []>, precision = #tpu.contract_precision<fp32>} : vector<32x16xf32>, vector<16x256xf32>, vector<32x256xf32> -> vector<32x256xf32>
    %c0_4 = arith.constant 0 : index
    %c0_5 = arith.constant 0 : index
    %4 = vector.load %arg4[%c0_4, %c0_5] : memref<32x1xf32, #tpu.memory_space<vmem>>, vector<32x1xf32>
    %5 = vector.broadcast %4 : vector<32x1xf32> to vector<32x256xf32>
    %6 = arith.addf %3, %5 : vector<32x256xf32>
    %c0_6 = arith.constant 0 : index
    %c0_7 = arith.constant 0 : index
    %c0_8 = arith.constant 0 : index
    %7 = vector.load %arg5[%c0_6, %c0_7, %c0_8] : memref<1x32x256xf32, #tpu.memory_space<vmem>>, vector<1x32x256xf32>
    %8 = vector.shape_cast %7 : vector<1x32x256xf32> to vector<32x256xf32>
    %9 = vector.shape_cast %6 : vector<32x256xf32> to vector<1x32x256xf32>
    tpu.vector_store %arg5[%c0_6, %c0_7, %c0_8], %9 {strides = array<i32>} : memref<1x32x256xf32, #tpu.memory_space<vmem>>, vector<1x32x256xf32>,
    return
  }
  func.func @transform_0(%arg0: i32, %arg1: i32) -> (i32, i32, i32) {
    %c0_i32 = arith.constant 0 : i32
    %c0_i32_0 = arith.constant 0 : i32
    return %arg0, %c0_i32, %arg1 : i32, i32, i32
  }
  func.func @transform_1(%arg0: i32, %arg1: i32) -> (i32, i32) {
    %c0_i32 = arith.constant 0 : i32
    %c0_i32_0 = arith.constant 0 : i32
    %c0_i32_1 = arith.constant 0 : i32
    return %c0_i32, %c0_i32_0 : i32, i32
  }
  func.func @transform_2(%arg0: i32, %arg1: i32) -> (i32, i32) {
    %c0_i32 = arith.constant 0 : i32
    %c0_i32_0 = arith.constant 0 : i32
    %c0_i32_1 = arith.constant 0 : i32
    return %c0_i32, %c0_i32_0 : i32, i32
  }
  func.func @transform_3(%arg0: i32, %arg1: i32) -> (i32, i32, i32) {
    %c0_i32 = arith.constant 0 : i32
    %c0_i32_0 = arith.constant 0 : i32
    return %arg0, %c0_i32, %arg1 : i32, i32, i32
  }
}

</mosaic_0001>

<llo_original>
// kernel: tile.8
$region0: #{tile.8}
  #allocation0 [shape = 's32[1]{0}', space=sflag, size = 0x4, scoped, tag = 'scoped memory for tile.8']
  %s0 = inlined_call_operand.vmem [shape: f32[8], index: 0, kind: input, shape index: {}]
  %s1 = inlined_call_operand.vmem [shape: f32[4,8], index: 1, kind: output, shape index: {}]
  // Predicated region
  $region2: #{tile.8} parent=0 // pred_check
    _
  $region3: #{tile.8} parent=0 // pred_check_branch
    %3 = sbr.rel (0) target = $region5
  $region4: #{tile.8} parent=0 // pred_region
    _
  $region5: #{tile.8} parent=0 // pred_fallthru
    _
  %v4 = vld [vmem:[%s0] ss:$0 sm:$0xff]
  %5 = vst [vmem:[%s1] sm:$0xf] %v4

// kernel: tile.0
$region0: #{tile.0}
  %s0 = inlined_call_operand.vmem [shape: f32[4,8], index: 0, kind: input, shape index: {}]
  %s1 = inlined_call_operand.vmem [shape: f32[32,1], index: 1, kind: output, shape index: {}]
  $region1: #{tile.0} parent=0
    #allocation0 [shape = 'u8[4096]{0}', space=vmem, size = 0x1000, scoped, tag = 'scoped mem for input reshape']
    %s3 = ssub.s32 16, 1
    %v4 = vld [vmem:[%s0] sm:%s3]
    %5 = vst [vmem:[#allocation0] sm:%s3] %v4
    %v6 = vld [vmem:[#allocation0] sm:$0xf]
    %vm7 = vcmask 7168
    %8 = vst.msk [vmem:[%s1] ss:$8 sm:$0xf] %vm7, %v6
    %v9 = vld [vmem:[#allocation0] sm:$0xf]
    %10 = vrot.lane.b32.xlu0 %v9, 127
    %v11 = vpop.permute.xlu0 %10
    %vm12 = vcmask 7168
    %s13 = scalar_lea.vmem %s1, 1
    %14 = vst.msk [vmem:[%s13] ss:$8 sm:$0xf] %vm12, %v11
    %v15 = vld [vmem:[#allocation0] sm:$0xf]
    %16 = vrot.lane.b32.xlu0 %v15, 126
    %v17 = vpop.permute.xlu0 %16
    %vm18 = vcmask 7168
    %s19 = scalar_lea.vmem %s1, 2
    %20 = vst.msk [vmem:[%s19] ss:$8 sm:$0xf] %vm18, %v17
    %v21 = vld [vmem:[#allocation0] sm:$0xf]
    %22 = vrot.lane.b32.xlu0 %v21, 125
    %v23 = vpop.permute.xlu0 %22
    %vm24 = vcmask 7168
    %s25 = scalar_lea.vmem %s1, 3
    %26 = vst.msk [vmem:[%s25] ss:$8 sm:$0xf] %vm24, %v23
    %v27 = vld [vmem:[#allocation0] sm:$0xf]
    %28 = vrot.lane.b32.xlu0 %v27, 124
    %v29 = vpop.permute.xlu0 %28
    %vm30 = vcmask 7168
    %s31 = scalar_lea.vmem %s1, 4
    %32 = vst.msk [vmem:[%s31] ss:$8 sm:$0xf] %vm30, %v29
    %v33 = vld [vmem:[#allocation0] sm:$0xf]
    %34 = vrot.lane.b32.xlu0 %v33, 123
    %v35 = vpop.permute.xlu0 %34
    %vm36 = vcmask 7168
    %s37 = scalar_lea.vmem %s1, 5
    %38 = vst.msk [vmem:[%s37] ss:$8 sm:$0xf] %vm36, %v35
    %v39 = vld [vmem:[#allocation0] sm:$0xf]
    %40 = vrot.lane.b32.xlu0 %v39, 122
    %v41 = vpop.permute.xlu0 %40
    %vm42 = vcmask 7168
    %s43 = scalar_lea.vmem %s1, 6
    %44 = vst.msk [vmem:[%s43] ss:$8 sm:$0xf] %vm42, %v41
    %v45 = vld [vmem:[#allocation0] sm:$0xf]
    %46 = vrot.lane.b32.xlu0 %v45, 121
    %v47 = vpop.permute.xlu0 %46
    %vm48 = vcmask 7168
    %s49 = scalar_lea.vmem %s1, 7
    %50 = vst.msk [vmem:[%s49] ss:$8 sm:$0xf] %vm48, %v47

// kernel: hw_upsampling.1
$region0: #{hw_upsampling.1}
  #allocation0 [shape = 'u32[]', space=smem, size = 0x4, offset = 0x4, fixed_abs, tag = 'smem constant byte address 0x4 - core index']
  #allocation1 [shape = 'u32[72,128]{1,0:T(1,128)}', space=vmem, size = 0x9000, scoped, tag = 'internal scratch']
  %s0 = inlined_call_operand.vmem [shape: f32[2,16,256], index: 0, kind: input, shape index: {}]
  %s1 = inlined_call_operand.vmem [shape: f32[32,16], index: 1, kind: input, shape index: {}]
  %s2 = inlined_call_operand.vmem [shape: f32[32,1], index: 2, kind: input, shape index: {}]
  %s3 = inlined_call_operand.vmem [shape: f32[2,32,256], index: 3, kind: output, shape index: {}]
  %s4 = sld [smem:[#allocation0]]
  $region45: #{hw_upsampling.1} parent=0
    _
  %s6 = ssub.s32 1, %s4
  %s7 = scalar_select 0, %s6, %s4
  loop: start=0, step=1, limit=4
  $region2: #{hw_upsampling.1} parent=0 // loop_pre_header
    _
  $region3: #{hw_upsampling.1} parent=0 // loop_header
    %s9 = sphi 0, %s13
    %p10 = scmp.ge.s32.totalorder %s9, 4
    %s16 = sphi 0, %s28
    %s17 = sphi 0, %s24
    %s18 = sphi 0, %s16
    %s19 = sphi 0, %s17
    %s20 = sphi 0, %s18
    %s21 = sphi 0, %s19
    %s33 = sphi 0, %s35
    %s36 = sphi 0, %s33
    %s37 = sphi 0, %s36
    %s53 = sphi 0, %s37
    %s57 = sphi 0, %s57
    %s59 = sphi 0, %s57
    %s60 = sphi 0, %s59
    %s74 = sphi 0, %s60
    %s78 = sphi 0, %s78
    %s80 = sphi 0, %s78
    %s81 = sphi 0, %s80
    %s95 = sphi 0, %s81
    %s103 = sphi 0, %s105
    %s106 = sphi 0, %s103
    %s107 = sphi 0, %s106
    %s123 = sphi 0, %s107
  $region4: #{hw_upsampling.1} parent=0 // loop_header_branch
    %12 = sbr.rel (%p10) target = $region8
  $region5: #{hw_upsampling.1} parent=0 // loop_body
    %s14 = ssub.s32 %s9, 1
    %s15 = ssub.s32 %s9, 2
    %s22 = sadd.s32 1, %s17
    %p23 = scmp.ge.s32.totalorder %s22, 1
    %s24 = scalar_select %p23, 0, %s22
    %s25 = sadd.s32 1, %s16
    %s26 = scalar_select %p23, %s25, %s16
    %p27 = scmp.ge.s32.totalorder %s26, 2
    %s28 = scalar_select %p27, 0, %s26
    %s29 = ssub.s32 %s16, %s28
    %s30 = ssub.s32 %s17, %s24
    %s31 = sor.u32 %s29, %s30
    %p32 = scmp.eq.s32.totalorder %s31, 0
    %s34 = sadd.s32 %s33, 1
    %s35 = scalar_select %p32, %s33, %s34
    %p38 = pneg %p32
    %p39 = scmp.eq.s32.totalorder %s9, 1
    %p40 = por %p38, %p39
    %p41 = scmp.ne.s32.totalorder %s33, %s36
    %p42 = scmp.eq.s32.totalorder %s9, 0
    %p43 = por %p41, %p42
    %p44 = scmp.ne.s32.totalorder %s33, %s36
    %p45 = scmp.eq.s32.totalorder %s14, 1
    %p46 = por %p44, %p45
    %p47 = scmp.ne.s32.totalorder %s36, %s37
    %p48 = scmp.eq.s32.totalorder %s14, 0
    %p49 = por %p47, %p48
    %p50 = scmp.ne.s32.totalorder %s36, %s37
    %p51 = scmp.eq.s32.totalorder %s15, 1
    %p52 = por %p50, %p51
    %p54 = scmp.ne.s32.totalorder %s37, %s53
    %p55 = scmp.eq.s32.totalorder %s15, 0
    %p56 = por %p54, %p55
    %s58 = sadd.s32 %s57, 1
    %p61 = scmp.eq.s32.totalorder %s9, 1
    %p62 = scmp.ne.s32.totalorder %s57, %s59
    %p63 = scmp.eq.s32.totalorder %s9, 0
    %p64 = por %p62, %p63
    %p65 = scmp.ne.s32.totalorder %s57, %s59
    %p66 = scmp.eq.s32.totalorder %s14, 1
    %p67 = por %p65, %p66
    %p68 = scmp.ne.s32.totalorder %s59, %s60
    %p69 = scmp.eq.s32.totalorder %s14, 0
    %p70 = por %p68, %p69
    %p71 = scmp.ne.s32.totalorder %s59, %s60
    %p72 = scmp.eq.s32.totalorder %s15, 1
    %p73 = por %p71, %p72
    %p75 = scmp.ne.s32.totalorder %s60, %s74
    %p76 = scmp.eq.s32.totalorder %s15, 0
    %p77 = por %p75, %p76
    %s79 = sadd.s32 %s78, 1
    %p82 = scmp.eq.s32.totalorder %s9, 1
    %p83 = scmp.ne.s32.totalorder %s78, %s80
    %p84 = scmp.eq.s32.totalorder %s9, 0
    %p85 = por %p83, %p84
    %p86 = scmp.ne.s32.totalorder %s78, %s80
    %p87 = scmp.eq.s32.totalorder %s14, 1
    %p88 = por %p86, %p87
    %p89 = scmp.ne.s32.totalorder %s80, %s81
    %p90 = scmp.eq.s32.totalorder %s14, 0
    %p91 = por %p89, %p90
    %p92 = scmp.ne.s32.totalorder %s80, %s81
    %p93 = scmp.eq.s32.totalorder %s15, 1
    %p94 = por %p92, %p93
    %p96 = scmp.ne.s32.totalorder %s81, %s95
    %p97 = scmp.eq.s32.totalorder %s15, 0
    %p98 = por %p96, %p97
    %s99 = ssub.s32 %s16, %s28
    %s100 = ssub.s32 %s17, %s24
    %s101 = sor.u32 %s99, %s100
    %p102 = scmp.eq.s32.totalorder %s101, 0
    %s104 = sadd.s32 %s103, 1
    %s105 = scalar_select %p102, %s103, %s104
    %p108 = pneg %p102
    %p109 = scmp.eq.s32.totalorder %s9, 1
    %p110 = por %p108, %p109
    %p111 = scmp.ne.s32.totalorder %s103, %s106
    %p112 = scmp.eq.s32.totalorder %s9, 0
    %p113 = por %p111, %p112
    %p114 = scmp.ne.s32.totalorder %s103, %s106
    %p115 = scmp.eq.s32.totalorder %s14, 1
    %p116 = por %p114, %p115
    %p117 = scmp.ne.s32.totalorder %s106, %s107
    %p118 = scmp.eq.s32.totalorder %s14, 0
    %p119 = por %p117, %p118
    %p120 = scmp.ne.s32.totalorder %s106, %s107
    %p121 = scmp.eq.s32.totalorder %s15, 1
    %p122 = por %p120, %p121
    %p124 = scmp.ne.s32.totalorder %s107, %s123
    %p125 = scmp.eq.s32.totalorder %s15, 0
    %p126 = por %p124, %p125
    %p127 = scmp.le.s32.totalorder 1, %s9
    %p128 = scmp.lt.s32.totalorder %s9, 3
    %p129 = pnand %p127, %p128
    %p130 = pneg %p129
    // Predicated region
    $region9: #{hw_upsampling.1} parent=5 // pred_check
      _
    $region10: #{hw_upsampling.1} parent=5 // pred_check_branch
      %132 = sbr.rel (%p129) target = $region12
    $region11: #{hw_upsampling.1} parent=5 // pred_region
      %s133 = ssub.s32 %s9, 1
      // Predicated region
      $region13: #{hw_upsampling.1} parent=11 // pred_check
        %p134 = pneg %p70
      $region14: #{hw_upsampling.1} parent=11 // pred_check_branch
        %136 = sbr.rel (%p134) target = $region16
      $region15: #{hw_upsampling.1} parent=11 // pred_region
        _
      $region16: #{hw_upsampling.1} parent=11 // pred_fallthru
        _
      // Predicated region
      $region17: #{hw_upsampling.1} parent=11 // pred_check
        %p137 = pneg %p91
      $region18: #{hw_upsampling.1} parent=11 // pred_check_branch
        %139 = sbr.rel (%p137) target = $region20
      $region19: #{hw_upsampling.1} parent=11 // pred_region
        _
      $region20: #{hw_upsampling.1} parent=11 // pred_fallthru
        _
    $region12: #{hw_upsampling.1} parent=5 // pred_fallthru
      _
    %p140 = scmp.lt.s32.totalorder %s9, 2
    // Predicated region
    $region21: #{hw_upsampling.1} parent=5 // pred_check
      %p141 = pneg %p140
    $region22: #{hw_upsampling.1} parent=5 // pred_check_branch
      %143 = sbr.rel (%p141) target = $region24
    $region23: #{hw_upsampling.1} parent=5 // pred_region
      // Predicated region
      $region25: #{hw_upsampling.1} parent=23 // pred_check
        %p144 = pneg %p43
      $region26: #{hw_upsampling.1} parent=23 // pred_check_branch
        %146 = sbr.rel (%p144) target = $region28
      $region27: #{hw_upsampling.1} parent=23 // pred_region
        %s147 = smul.u32 2, %s17
        %p148 = scmp.lt.s32.totalorder %s16, 1
        %s149 = scalar_select %p148, %s16, 1
        %p150 = scmp.lt.s32.totalorder %s147, 1
        %s151 = scalar_select %p150, %s147, 1
        %s152 = smul.addr %s149, 4
        %s153 = sadd.s32 %s151, %s152
        %s154 = smul.addr %s153, 8
        %s155 = scalar_lea.vmem %s0, %s154
        %s156 = smul.u32 2, %s17
      $region28: #{hw_upsampling.1} parent=23 // pred_fallthru
        _
    $region24: #{hw_upsampling.1} parent=5 // pred_fallthru
      _
    %p157 = scmp.le.s32.totalorder 1, %s9
    %p158 = scmp.lt.s32.totalorder %s9, 3
    %p159 = pnand %p157, %p158
    %p160 = pneg %p159
    // Predicated region
    $region29: #{hw_upsampling.1} parent=5 // pred_check
      _
    $region30: #{hw_upsampling.1} parent=5 // pred_check_branch
      %162 = sbr.rel (%p159) target = $region32
    $region31: #{hw_upsampling.1} parent=5 // pred_region
      %s163 = ssub.s32 %s9, 1
      %s164 = smul.u32 2, %s19
      %p165 = scmp.lt.s32.totalorder %s18, 1
      %s166 = scalar_select %p165, %s18, 1
      %p167 = scmp.lt.s32.totalorder %s164, 1
      %s168 = scalar_select %p167, %s164, 1
      %s169 = smul.addr %s166, 4
      %s170 = sadd.s32 %s168, %s169
      %s171 = smul.addr %s170, 8
      %s172 = scalar_lea.vmem %s0, %s171
      %p173 = pneg %p49
      %p174 = pneg %p46
      %p175 = pneg %p70
      %p176 = pneg %p67
      %p177 = pneg %p91
      %p178 = pneg %p88
      %p179 = pneg %p119
      %p180 = pneg %p116
      %s181 = smul.u32 2, %s19
      %p182 = scmp.lt.s32.totalorder %s18, 1
      %s183 = scalar_select %p182, %s18, 1
      %p184 = scmp.lt.s32.totalorder %s181, 1
      %s185 = scalar_select %p184, %s181, 1
      %s186 = smul.addr %s183, 8
      %s187 = sadd.s32 %s185, %s186
      %s188 = smul.addr %s187, 8
      %s189 = scalar_lea.vmem %s3, %s188
      %s190 = smul.u32 2, %s19
      %p191 = scmp.lt.s32.totalorder %s18, 1
      %s192 = scalar_select %p191, %s18, 1
      %p193 = scmp.lt.s32.totalorder %s190, 1
      %s194 = scalar_select %p193, %s190, 1
      %s195 = smul.addr %s192, 4
      %s196 = sadd.s32 %s194, %s195
      %s197 = smul.addr %s196, 8
      %s198 = scalar_lea.vmem %s0, %s197
      %s199 = smul.u32 2, %s19
      %s200 = smul.u32 2, %s19
      %p201 = scmp.lt.s32.totalorder %s18, 1
      %s202 = scalar_select %p201, %s18, 1
      %p203 = scmp.lt.s32.totalorder %s200, 1
      %s204 = scalar_select %p203, %s200, 1
      %s205 = smul.addr %s202, 8
      %s206 = sadd.s32 %s204, %s205
      %s207 = smul.addr %s206, 8
      %s208 = scalar_lea.vmem %s3, %s207
      %s209 = smul.u32 2, %s19
      %v210 = vld [vmem:[%s198] sm:$0xff]
      %v211 = vld [vmem:[%s198 + $0x8] sm:$0xff]
      %v212 = vld [vmem:[%s198 + $0x10] sm:$0xff]
      %v213 = vld [vmem:[%s198 + $0x18] sm:$0xff]
      %v214 = vld [vmem:[%s1] sm:$0xff]
      %v215 = vld [vmem:[%s1 + $0x8] sm:$0xff]
      %v216 = vld [vmem:[%s1 + $0x10] sm:$0xff]
      %v217 = vld [vmem:[%s1 + $0x18] sm:$0xff]
      %v218 = vld [vmem:[%s2] sm:$0xff]
      %v219 = vld [vmem:[%s2 + $0x8] sm:$0xff]
      %v220 = vld [vmem:[%s2 + $0x10] sm:$0xff]
      %v221 = vld [vmem:[%s2 + $0x18] sm:$0xff]
      %223 = vset.pattern.permute.xlu0 0
      %224 = vperm.xlu0 %223, %v218
      %v225 = vpop.permute.xlu0 %224
      %228 = vset.pattern.permute.xlu0 0
      %229 = vperm.xlu0 %228, %v219
      %v230 = vpop.permute.xlu0 %229
      %233 = vset.pattern.permute.xlu0 0
      %234 = vperm.xlu0 %233, %v220
      %v235 = vpop.permute.xlu0 %234
      %238 = vset.pattern.permute.xlu0 0
      %239 = vperm.xlu0 %238, %v221
      %v240 = vpop.permute.xlu0 %239
      %vm242 = vcmask 130048
      %v244 = vsel %vm242, %v214, 0
      %v247 = vsel %vm242, %v215, 0
      %v250 = vsel %vm242, %v216, 0
      %v253 = vsel %vm242, %v217, 0
      %255 = vmatpush.msra.mxu0 0.0
      %256 = vmatpush.msra.mxu0 0.0
      %257 = vmatpush.msra.mxu0 0.0
      %258 = vmatpush.msra.mxu0 0.0
      %259 = vmatpush.msra.mxu0 0.0
      %260 = vmatpush.msra.mxu0 0.0
      %261 = vmatpush.msra.mxu0 0.0
      %262 = vmatpush.msra.mxu0 0.0
      %263 = vmatpush.msra.mxu0 0.0
      %264 = vmatpush.msra.mxu0 0.0
      %265 = vmatpush.msra.mxu0 0.0
      %266 = vmatpush.msra.mxu0 0.0
      %267 = vmatpush.msra.mxu0 0.0
      %268 = vmatpush.msra.mxu0 0.0
      %v269 = vand.u32 %v212, 4294901760
      %270 = vmatpush.msra.mxu0 %v269
      %v271 = vand.u32 %v210, 4294901760
      %272 = vmatpush.msra.mxu0 %v271
      %v273 = vand.u32 %v244, 4294901760
      %v274 = vsub.f32 %v244, %v273
      %v275 = vand.u32 %v274, 4294901760
      %v276 = vsub.f32 %v274, %v275
      %v277 = vand.u32 %v276, 4294901760
      %278 = vmatmul.f32.gmra.mxu0 %v277
      %v279 = vpop.f32.mrf.mxu0
      %v280 = vadd.f32 %v225, %v279
      %v281 = vand.u32 %v247, 4294901760
      %v282 = vsub.f32 %v247, %v281
      %v283 = vand.u32 %v282, 4294901760
      %v284 = vsub.f32 %v282, %v283
      %v285 = vand.u32 %v284, 4294901760
      %286 = vmatmul.f32.gmra.mxu0 %v285
      %v287 = vpop.f32.mrf.mxu0
      %v288 = vadd.f32 %v230, %v287
      %v289 = vand.u32 %v250, 4294901760
      %v290 = vsub.f32 %v250, %v289
      %v291 = vand.u32 %v290, 4294901760
      %v292 = vsub.f32 %v290, %v291
      %v293 = vand.u32 %v292, 4294901760
      %294 = vmatmul.f32.gmra.mxu0 %v293
      %v295 = vpop.f32.mrf.mxu0
      %v296 = vadd.f32 %v235, %v295
      %v297 = vand.u32 %v253, 4294901760
      %v298 = vsub.f32 %v253, %v297
      %v299 = vand.u32 %v298, 4294901760
      %v300 = vsub.f32 %v298, %v299
      %v301 = vand.u32 %v300, 4294901760
      %302 = vmatmul.f32.gmra.mxu0 %v301
      %v303 = vpop.f32.mrf.mxu0
      %v304 = vadd.f32 %v240, %v303
      %305 = vdwg.mxu0
      %306 = vmatpush.msra.mxu0 0.0
      %307 = vmatpush.msra.mxu0 0.0
      %308 = vmatpush.msra.mxu0 0.0
      %309 = vmatpush.msra.mxu0 0.0
      %310 = vmatpush.msra.mxu0 0.0
      %311 = vmatpush.msra.mxu0 0.0
      %312 = vmatpush.msra.mxu0 0.0
      %313 = vmatpush.msra.mxu0 0.0
      %314 = vmatpush.msra.mxu0 0.0
      %315 = vmatpush.msra.mxu0 0.0
      %316 = vmatpush.msra.mxu0 0.0
      %317 = vmatpush.msra.mxu0 0.0
      %318 = vmatpush.msra.mxu0 0.0
      %319 = vmatpush.msra.mxu0 0.0
      %v320 = vand.u32 %v212, 4294901760
      %v321 = vsub.f32 %v212, %v320
      %v322 = vand.u32 %v321, 4294901760
      %v323 = vsub.f32 %v321, %v322
      %v324 = vand.u32 %v323, 4294901760
      %325 = vmatpush.msra.mxu0 %v324
      %v326 = vand.u32 %v210, 4294901760
      %v327 = vsub.f32 %v210, %v326
      %v328 = vand.u32 %v327, 4294901760
      %v329 = vsub.f32 %v327, %v328
      %v330 = vand.u32 %v329, 4294901760
      %331 = vmatpush.msra.mxu0 %v330
      %v332 = vand.u32 %v244, 4294901760
      %333 = vmatmul.f32.gmra.mxu0 %v332
      %v334 = vpop.f32.mrf.mxu0
      %v335 = vadd.f32 %v280, %v334
      %v336 = vand.u32 %v247, 4294901760
      %337 = vmatmul.f32.gmra.mxu0 %v336
      %v338 = vpop.f32.mrf.mxu0
      %v339 = vadd.f32 %v288, %v338
      %v340 = vand.u32 %v250, 4294901760
      %341 = vmatmul.f32.gmra.mxu0 %v340
      %v342 = vpop.f32.mrf.mxu0
      %v343 = vadd.f32 %v296, %v342
      %v344 = vand.u32 %v253, 4294901760
      %345 = vmatmul.f32.gmra.mxu0 %v344
      %v346 = vpop.f32.mrf.mxu0
      %v347 = vadd.f32 %v304, %v346
      %348 = vdwg.mxu0
      %349 = vmatpush.msra.mxu0 0.0
      %350 = vmatpush.msra.mxu0 0.0
      %351 = vmatpush.msra.mxu0 0.0
      %352 = vmatpush.msra.mxu0 0.0
      %353 = vmatpush.msra.mxu0 0.0
      %354 = vmatpush.msra.mxu0 0.0
      %355 = vmatpush.msra.mxu0 0.0
      %356 = vmatpush.msra.mxu0 0.0
      %357 = vmatpush.msra.mxu0 0.0
      %358 = vmatpush.msra.mxu0 0.0
      %359 = vmatpush.msra.mxu0 0.0
      %360 = vmatpush.msra.mxu0 0.0
      %361 = vmatpush.msra.mxu0 0.0
      %362 = vmatpush.msra.mxu0 0.0
      %v363 = vand.u32 %v212, 4294901760
      %v364 = vsub.f32 %v212, %v363
      %365 = vmatpush.msra.mxu0 %v364
      %v366 = vand.u32 %v210, 4294901760
      %v367 = vsub.f32 %v210, %v366
      %368 = vmatpush.msra.mxu0 %v367
      %v369 = vand.u32 %v244, 4294901760
      %v370 = vsub.f32 %v244, %v369
      %371 = vmatmul.f32.gmra.mxu0 %v370
      %v372 = vpop.f32.mrf.mxu0
      %v373 = vadd.f32 %v335, %v372
      %v374 = vand.u32 %v247, 4294901760
      %v375 = vsub.f32 %v247, %v374
      %376 = vmatmul.f32.gmra.mxu0 %v375
      %v377 = vpop.f32.mrf.mxu0
      %v378 = vadd.f32 %v339, %v377
      %v379 = vand.u32 %v250, 4294901760
      %v380 = vsub.f32 %v250, %v379
      %381 = vmatmul.f32.gmra.mxu0 %v380
      %v382 = vpop.f32.mrf.mxu0
      %v383 = vadd.f32 %v343, %v382
      %v384 = vand.u32 %v253, 4294901760
      %v385 = vsub.f32 %v253, %v384
      %386 = vmatmul.f32.gmra.mxu0 %v385
      %v387 = vpop.f32.mrf.mxu0
      %v388 = vadd.f32 %v347, %v387
      %389 = vdwg.mxu0
      %390 = vmatpush.msra.mxu0 0.0
      %391 = vmatpush.msra.mxu0 0.0
      %392 = vmatpush.msra.mxu0 0.0
      %393 = vmatpush.msra.mxu0 0.0
      %394 = vmatpush.msra.mxu0 0.0
      %395 = vmatpush.msra.mxu0 0.0
      %396 = vmatpush.msra.mxu0 0.0
      %397 = vmatpush.msra.mxu0 0.0
      %398 = vmatpush.msra.mxu0 0.0
      %399 = vmatpush.msra.mxu0 0.0
      %400 = vmatpush.msra.mxu0 0.0
      %401 = vmatpush.msra.mxu0 0.0
      %402 = vmatpush.msra.mxu0 0.0
      %403 = vmatpush.msra.mxu0 0.0
      %v404 = vand.u32 %v212, 4294901760
      %405 = vmatpush.msra.mxu0 %v404
      %v406 = vand.u32 %v210, 4294901760
      %407 = vmatpush.msra.mxu0 %v406
      %v408 = vand.u32 %v244, 4294901760
      %v409 = vsub.f32 %v244, %v408
      %v410 = vand.u32 %v409, 4294901760
      %411 = vmatmul.f32.gmra.mxu0 %v410
      %v412 = vpop.f32.mrf.mxu0
      %v413 = vadd.f32 %v373, %v412
      %v414 = vand.u32 %v247, 4294901760
      %v415 = vsub.f32 %v247, %v414
      %v416 = vand.u32 %v415, 4294901760
      %417 = vmatmul.f32.gmra.mxu0 %v416
      %v418 = vpop.f32.mrf.mxu0
      %v419 = vadd.f32 %v378, %v418
      %v420 = vand.u32 %v250, 4294901760
      %v421 = vsub.f32 %v250, %v420
      %v422 = vand.u32 %v421, 4294901760
      %423 = vmatmul.f32.gmra.mxu0 %v422
      %v424 = vpop.f32.mrf.mxu0
      %v425 = vadd.f32 %v383, %v424
      %v426 = vand.u32 %v253, 4294901760
      %v427 = vsub.f32 %v253, %v426
      %v428 = vand.u32 %v427, 4294901760
      %429 = vmatmul.f32.gmra.mxu0 %v428
      %v430 = vpop.f32.mrf.mxu0
      %v431 = vadd.f32 %v388, %v430
      %432 = vdwg.mxu0
      %433 = vmatpush.msra.mxu0 0.0
      %434 = vmatpush.msra.mxu0 0.0
      %435 = vmatpush.msra.mxu0 0.0
      %436 = vmatpush.msra.mxu0 0.0
      %437 = vmatpush.msra.mxu0 0.0
      %438 = vmatpush.msra.mxu0 0.0
      %439 = vmatpush.msra.mxu0 0.0
      %440 = vmatpush.msra.mxu0 0.0
      %441 = vmatpush.msra.mxu0 0.0
      %442 = vmatpush.msra.mxu0 0.0
      %443 = vmatpush.msra.mxu0 0.0
      %444 = vmatpush.msra.mxu0 0.0
      %445 = vmatpush.msra.mxu0 0.0
      %446 = vmatpush.msra.mxu0 0.0
      %v447 = vand.u32 %v212, 4294901760
      %v448 = vsub.f32 %v212, %v447
      %v449 = vand.u32 %v448, 4294901760
      %450 = vmatpush.msra.mxu0 %v449
      %v451 = vand.u32 %v210, 4294901760
      %v452 = vsub.f32 %v210, %v451
      %v453 = vand.u32 %v452, 4294901760
      %454 = vmatpush.msra.mxu0 %v453
      %v455 = vand.u32 %v244, 4294901760
      %456 = vmatmul.f32.gmra.mxu0 %v455
      %v457 = vpop.f32.mrf.mxu0
      %v458 = vadd.f32 %v413, %v457
      %v459 = vand.u32 %v247, 4294901760
      %460 = vmatmul.f32.gmra.mxu0 %v459
      %v461 = vpop.f32.mrf.mxu0
      %v462 = vadd.f32 %v419, %v461
      %v463 = vand.u32 %v250, 4294901760
      %464 = vmatmul.f32.gmra.mxu0 %v463
      %v465 = vpop.f32.mrf.mxu0
      %v466 = vadd.f32 %v425, %v465
      %v467 = vand.u32 %v253, 4294901760
      %468 = vmatmul.f32.gmra.mxu0 %v467
      %v469 = vpop.f32.mrf.mxu0
      %v470 = vadd.f32 %v431, %v469
      %471 = vdwg.mxu0
      %472 = vmatpush.msra.mxu0 0.0
      %473 = vmatpush.msra.mxu0 0.0
      %474 = vmatpush.msra.mxu0 0.0
      %475 = vmatpush.msra.mxu0 0.0
      %476 = vmatpush.msra.mxu0 0.0
      %477 = vmatpush.msra.mxu0 0.0
      %478 = vmatpush.msra.mxu0 0.0
      %479 = vmatpush.msra.mxu0 0.0
      %480 = vmatpush.msra.mxu0 0.0
      %481 = vmatpush.msra.mxu0 0.0
      %482 = vmatpush.msra.mxu0 0.0
      %483 = vmatpush.msra.mxu0 0.0
      %484 = vmatpush.msra.mxu0 0.0
      %485 = vmatpush.msra.mxu0 0.0
      %v486 = vand.u32 %v212, 4294901760
      %487 = vmatpush.msra.mxu0 %v486
      %v488 = vand.u32 %v210, 4294901760
      %489 = vmatpush.msra.mxu0 %v488
      %v490 = vand.u32 %v244, 4294901760
      %491 = vmatmul.f32.gmra.mxu0 %v490
      %v492 = vpop.f32.mrf.mxu0
      %v493 = vadd.f32 %v458, %v492
      %v494 = vand.u32 %v247, 4294901760
      %495 = vmatmul.f32.gmra.mxu0 %v494
      %v496 = vpop.f32.mrf.mxu0
      %v497 = vadd.f32 %v462, %v496
      %v498 = vand.u32 %v250, 4294901760
      %499 = vmatmul.f32.gmra.mxu0 %v498
      %v500 = vpop.f32.mrf.mxu0
      %v501 = vadd.f32 %v466, %v500
      %v502 = vand.u32 %v253, 4294901760
      %503 = vmatmul.f32.gmra.mxu0 %v502
      %v504 = vpop.f32.mrf.mxu0
      %v505 = vadd.f32 %v470, %v504
      %506 = vdwg.mxu0
      %507 = vmatpush.msra.mxu0 0.0
      %508 = vmatpush.msra.mxu0 0.0
      %509 = vmatpush.msra.mxu0 0.0
      %510 = vmatpush.msra.mxu0 0.0
      %511 = vmatpush.msra.mxu0 0.0
      %512 = vmatpush.msra.mxu0 0.0
      %513 = vmatpush.msra.mxu0 0.0
      %514 = vmatpush.msra.mxu0 0.0
      %515 = vmatpush.msra.mxu0 0.0
      %516 = vmatpush.msra.mxu0 0.0
      %517 = vmatpush.msra.mxu0 0.0
      %518 = vmatpush.msra.mxu0 0.0
      %519 = vmatpush.msra.mxu0 0.0
      %520 = vmatpush.msra.mxu0 0.0
      %v521 = vand.u32 %v213, 4294901760
      %522 = vmatpush.msra.mxu0 %v521
      %v523 = vand.u32 %v211, 4294901760
      %524 = vmatpush.msra.mxu0 %v523
      %v525 = vand.u32 %v244, 4294901760
      %v526 = vsub.f32 %v244, %v525
      %v527 = vand.u32 %v526, 4294901760
      %v528 = vsub.f32 %v526, %v527
      %v529 = vand.u32 %v528, 4294901760
      %530 = vmatmul.f32.gmra.mxu0 %v529
      %v531 = vpop.f32.mrf.mxu0
      %v532 = vadd.f32 %v225, %v531
      %v533 = vand.u32 %v247, 4294901760
      %v534 = vsub.f32 %v247, %v533
      %v535 = vand.u32 %v534, 4294901760
      %v536 = vsub.f32 %v534, %v535
      %v537 = vand.u32 %v536, 4294901760
      %538 = vmatmul.f32.gmra.mxu0 %v537
      %v539 = vpop.f32.mrf.mxu0
      %v540 = vadd.f32 %v230, %v539
      %v541 = vand.u32 %v250, 4294901760
      %v542 = vsub.f32 %v250, %v541
      %v543 = vand.u32 %v542, 4294901760
      %v544 = vsub.f32 %v542, %v543
      %v545 = vand.u32 %v544, 4294901760
      %546 = vmatmul.f32.gmra.mxu0 %v545
      %v547 = vpop.f32.mrf.mxu0
      %v548 = vadd.f32 %v235, %v547
      %v549 = vand.u32 %v253, 4294901760
      %v550 = vsub.f32 %v253, %v549
      %v551 = vand.u32 %v550, 4294901760
      %v552 = vsub.f32 %v550, %v551
      %v553 = vand.u32 %v552, 4294901760
      %554 = vmatmul.f32.gmra.mxu0 %v553
      %v555 = vpop.f32.mrf.mxu0
      %v556 = vadd.f32 %v240, %v555
      %557 = vdwg.mxu0
      %558 = vmatpush.msra.mxu0 0.0
      %559 = vmatpush.msra.mxu0 0.0
      %560 = vmatpush.msra.mxu0 0.0
      %561 = vmatpush.msra.mxu0 0.0
      %562 = vmatpush.msra.mxu0 0.0
      %563 = vmatpush.msra.mxu0 0.0
      %564 = vmatpush.msra.mxu0 0.0
      %565 = vmatpush.msra.mxu0 0.0
      %566 = vmatpush.msra.mxu0 0.0
      %567 = vmatpush.msra.mxu0 0.0
      %568 = vmatpush.msra.mxu0 0.0
      %569 = vmatpush.msra.mxu0 0.0
      %570 = vmatpush.msra.mxu0 0.0
      %571 = vmatpush.msra.mxu0 0.0
      %v572 = vand.u32 %v213, 4294901760
      %v573 = vsub.f32 %v213, %v572
      %v574 = vand.u32 %v573, 4294901760
      %v575 = vsub.f32 %v573, %v574
      %v576 = vand.u32 %v575, 4294901760
      %577 = vmatpush.msra.mxu0 %v576
      %v578 = vand.u32 %v211, 4294901760
      %v579 = vsub.f32 %v211, %v578
      %v580 = vand.u32 %v579, 4294901760
      %v581 = vsub.f32 %v579, %v580
      %v582 = vand.u32 %v581, 4294901760
      %583 = vmatpush.msra.mxu0 %v582
      %v584 = vand.u32 %v244, 4294901760
      %585 = vmatmul.f32.gmra.mxu0 %v584
      %v586 = vpop.f32.mrf.mxu0
      %v587 = vadd.f32 %v532, %v586
      %v588 = vand.u32 %v247, 4294901760
      %589 = vmatmul.f32.gmra.mxu0 %v588
      %v590 = vpop.f32.mrf.mxu0
      %v591 = vadd.f32 %v540, %v590
      %v592 = vand.u32 %v250, 4294901760
      %593 = vmatmul.f32.gmra.mxu0 %v592
      %v594 = vpop.f32.mrf.mxu0
      %v595 = vadd.f32 %v548, %v594
      %v596 = vand.u32 %v253, 4294901760
      %597 = vmatmul.f32.gmra.mxu0 %v596
      %v598 = vpop.f32.mrf.mxu0
      %v599 = vadd.f32 %v556, %v598
      %600 = vdwg.mxu0
      %601 = vmatpush.msra.mxu0 0.0
      %602 = vmatpush.msra.mxu0 0.0
      %603 = vmatpush.msra.mxu0 0.0
      %604 = vmatpush.msra.mxu0 0.0
      %605 = vmatpush.msra.mxu0 0.0
      %606 = vmatpush.msra.mxu0 0.0
      %607 = vmatpush.msra.mxu0 0.0
      %608 = vmatpush.msra.mxu0 0.0
      %609 = vmatpush.msra.mxu0 0.0
      %610 = vmatpush.msra.mxu0 0.0
      %611 = vmatpush.msra.mxu0 0.0
      %612 = vmatpush.msra.mxu0 0.0
      %613 = vmatpush.msra.mxu0 0.0
      %614 = vmatpush.msra.mxu0 0.0
      %v615 = vand.u32 %v213, 4294901760
      %v616 = vsub.f32 %v213, %v615
      %617 = vmatpush.msra.mxu0 %v616
      %v618 = vand.u32 %v211, 4294901760
      %v619 = vsub.f32 %v211, %v618
      %620 = vmatpush.msra.mxu0 %v619
      %v621 = vand.u32 %v244, 4294901760
      %v622 = vsub.f32 %v244, %v621
      %623 = vmatmul.f32.gmra.mxu0 %v622
      %v624 = vpop.f32.mrf.mxu0
      %v625 = vadd.f32 %v587, %v624
      %v626 = vand.u32 %v247, 4294901760
      %v627 = vsub.f32 %v247, %v626
      %628 = vmatmul.f32.gmra.mxu0 %v627
      %v629 = vpop.f32.mrf.mxu0
      %v630 = vadd.f32 %v591, %v629
      %v631 = vand.u32 %v250, 4294901760
      %v632 = vsub.f32 %v250, %v631
      %633 = vmatmul.f32.gmra.mxu0 %v632
      %v634 = vpop.f32.mrf.mxu0
      %v635 = vadd.f32 %v595, %v634
      %v636 = vand.u32 %v253, 4294901760
      %v637 = vsub.f32 %v253, %v636
      %638 = vmatmul.f32.gmra.mxu0 %v637
      %v639 = vpop.f32.mrf.mxu0
      %v640 = vadd.f32 %v599, %v639
      %641 = vdwg.mxu0
      %642 = vmatpush.msra.mxu0 0.0
      %643 = vmatpush.msra.mxu0 0.0
      %644 = vmatpush.msra.mxu0 0.0
      %645 = vmatpush.msra.mxu0 0.0
      %646 = vmatpush.msra.mxu0 0.0
      %647 = vmatpush.msra.mxu0 0.0
      %648 = vmatpush.msra.mxu0 0.0
      %649 = vmatpush.msra.mxu0 0.0
      %650 = vmatpush.msra.mxu0 0.0
      %651 = vmatpush.msra.mxu0 0.0
      %652 = vmatpush.msra.mxu0 0.0
      %653 = vmatpush.msra.mxu0 0.0
      %654 = vmatpush.msra.mxu0 0.0
      %655 = vmatpush.msra.mxu0 0.0
      %v656 = vand.u32 %v213, 4294901760
      %657 = vmatpush.msra.mxu0 %v656
      %v658 = vand.u32 %v211, 4294901760
      %659 = vmatpush.msra.mxu0 %v658
      %v660 = vand.u32 %v244, 4294901760
      %v661 = vsub.f32 %v244, %v660
      %v662 = vand.u32 %v661, 4294901760
      %663 = vmatmul.f32.gmra.mxu0 %v662
      %v664 = vpop.f32.mrf.mxu0
      %v665 = vadd.f32 %v625, %v664
      %v666 = vand.u32 %v247, 4294901760
      %v667 = vsub.f32 %v247, %v666
      %v668 = vand.u32 %v667, 4294901760
      %669 = vmatmul.f32.gmra.mxu0 %v668
      %v670 = vpop.f32.mrf.mxu0
      %v671 = vadd.f32 %v630, %v670
      %v672 = vand.u32 %v250, 4294901760
      %v673 = vsub.f32 %v250, %v672
      %v674 = vand.u32 %v673, 4294901760
      %675 = vmatmul.f32.gmra.mxu0 %v674
      %v676 = vpop.f32.mrf.mxu0
      %v677 = vadd.f32 %v635, %v676
      %v678 = vand.u32 %v253, 4294901760
      %v679 = vsub.f32 %v253, %v678
      %v680 = vand.u32 %v679, 4294901760
      %681 = vmatmul.f32.gmra.mxu0 %v680
      %v682 = vpop.f32.mrf.mxu0
      %v683 = vadd.f32 %v640, %v682
      %684 = vdwg.mxu0
      %685 = vmatpush.msra.mxu0 0.0
      %686 = vmatpush.msra.mxu0 0.0
      %687 = vmatpush.msra.mxu0 0.0
      %688 = vmatpush.msra.mxu0 0.0
      %689 = vmatpush.msra.mxu0 0.0
      %690 = vmatpush.msra.mxu0 0.0
      %691 = vmatpush.msra.mxu0 0.0
      %692 = vmatpush.msra.mxu0 0.0
      %693 = vmatpush.msra.mxu0 0.0
      %694 = vmatpush.msra.mxu0 0.0
      %695 = vmatpush.msra.mxu0 0.0
      %696 = vmatpush.msra.mxu0 0.0
      %697 = vmatpush.msra.mxu0 0.0
      %698 = vmatpush.msra.mxu0 0.0
      %v699 = vand.u32 %v213, 4294901760
      %v700 = vsub.f32 %v213, %v699
      %v701 = vand.u32 %v700, 4294901760
      %702 = vmatpush.msra.mxu0 %v701
      %v703 = vand.u32 %v211, 4294901760
      %v704 = vsub.f32 %v211, %v703
      %v705 = vand.u32 %v704, 4294901760
      %706 = vmatpush.msra.mxu0 %v705
      %v707 = vand.u32 %v244, 4294901760
      %708 = vmatmul.f32.gmra.mxu0 %v707
      %v709 = vpop.f32.mrf.mxu0
      %v710 = vadd.f32 %v665, %v709
      %v711 = vand.u32 %v247, 4294901760
      %712 = vmatmul.f32.gmra.mxu0 %v711
      %v713 = vpop.f32.mrf.mxu0
      %v714 = vadd.f32 %v671, %v713
      %v715 = vand.u32 %v250, 4294901760
      %716 = vmatmul.f32.gmra.mxu0 %v715
      %v717 = vpop.f32.mrf.mxu0
      %v718 = vadd.f32 %v677, %v717
      %v719 = vand.u32 %v253, 4294901760
      %720 = vmatmul.f32.gmra.mxu0 %v719
      %v721 = vpop.f32.mrf.mxu0
      %v722 = vadd.f32 %v683, %v721
      %723 = vdwg.mxu0
      %724 = vmatpush.msra.mxu0 0.0
      %725 = vmatpush.msra.mxu0 0.0
      %726 = vmatpush.msra.mxu0 0.0
      %727 = vmatpush.msra.mxu0 0.0
      %728 = vmatpush.msra.mxu0 0.0
      %729 = vmatpush.msra.mxu0 0.0
      %730 = vmatpush.msra.mxu0 0.0
      %731 = vmatpush.msra.mxu0 0.0
      %732 = vmatpush.msra.mxu0 0.0
      %733 = vmatpush.msra.mxu0 0.0
      %734 = vmatpush.msra.mxu0 0.0
      %735 = vmatpush.msra.mxu0 0.0
      %736 = vmatpush.msra.mxu0 0.0
      %737 = vmatpush.msra.mxu0 0.0
      %v738 = vand.u32 %v213, 4294901760
      %739 = vmatpush.msra.mxu0 %v738
      %v740 = vand.u32 %v211, 4294901760
      %741 = vmatpush.msra.mxu0 %v740
      %v742 = vand.u32 %v244, 4294901760
      %743 = vmatmul.f32.gmra.mxu0 %v742
      %v744 = vpop.f32.mrf.mxu0
      %v745 = vadd.f32 %v710, %v744
      %v746 = vand.u32 %v247, 4294901760
      %747 = vmatmul.f32.gmra.mxu0 %v746
      %v748 = vpop.f32.mrf.mxu0
      %v749 = vadd.f32 %v714, %v748
      %v750 = vand.u32 %v250, 4294901760
      %751 = vmatmul.f32.gmra.mxu0 %v750
      %v752 = vpop.f32.mrf.mxu0
      %v753 = vadd.f32 %v718, %v752
      %v754 = vand.u32 %v253, 4294901760
      %755 = vmatmul.f32.gmra.mxu0 %v754
      %v756 = vpop.f32.mrf.mxu0
      %v757 = vadd.f32 %v722, %v756
      %758 = vdwg.mxu0
      %759 = vst [vmem:[%s208] sm:$0xff] %v493
      %760 = vst [vmem:[%s208 + $0x8] sm:$0xff] %v745
      %761 = vst [vmem:[%s208 + $0x10] sm:$0xff] %v497
      %762 = vst [vmem:[%s208 + $0x18] sm:$0xff] %v749
      %763 = vst [vmem:[%s208 + $0x20] sm:$0xff] %v501
      %764 = vst [vmem:[%s208 + $0x28] sm:$0xff] %v753
      %765 = vst [vmem:[%s208 + $0x30] sm:$0xff] %v505
      %766 = vst [vmem:[%s208 + $0x38] sm:$0xff] %v757
      %s767 = smul.u32 2, %s19
      %p768 = scmp.lt.s32.totalorder %s18, 1
      %s769 = scalar_select %p768, %s18, 1
      %p770 = scmp.lt.s32.totalorder %s767, 1
      %s771 = scalar_select %p770, %s767, 1
      %s772 = smul.addr %s769, 8
      %s773 = sadd.s32 %s771, %s772
      %s774 = smul.addr %s773, 8
      %s775 = scalar_lea.vmem %s3, %s774
      // Predicated region
      $region33: #{hw_upsampling.1} parent=31 // pred_check
        %p776 = pneg %p116
      $region34: #{hw_upsampling.1} parent=31 // pred_check_branch
        %778 = sbr.rel (%p776) target = $region36
      $region35: #{hw_upsampling.1} parent=31 // pred_region
        %s779 = smul.u32 2, %s19
      $region36: #{hw_upsampling.1} parent=31 // pred_fallthru
        _
    $region32: #{hw_upsampling.1} parent=5 // pred_fallthru
      _
    %p780 = scmp.le.s32.totalorder 2, %s9
    // Predicated region
    $region37: #{hw_upsampling.1} parent=5 // pred_check
      %p781 = pneg %p780
    $region38: #{hw_upsampling.1} parent=5 // pred_check_branch
      %783 = sbr.rel (%p781) target = $region40
    $region39: #{hw_upsampling.1} parent=5 // pred_region
      %s784 = ssub.s32 %s9, 2
      // Predicated region
      $region41: #{hw_upsampling.1} parent=39 // pred_check
        %p785 = pneg %p122
      $region42: #{hw_upsampling.1} parent=39 // pred_check_branch
        %787 = sbr.rel (%p785) target = $region44
      $region43: #{hw_upsampling.1} parent=39 // pred_region
        %s788 = smul.u32 2, %s21
        %p789 = scmp.lt.s32.totalorder %s20, 1
        %s790 = scalar_select %p789, %s20, 1
        %p791 = scmp.lt.s32.totalorder %s788, 1
        %s792 = scalar_select %p791, %s788, 1
        %s793 = smul.addr %s790, 8
        %s794 = sadd.s32 %s792, %s793
        %s795 = smul.addr %s794, 8
        %s796 = scalar_lea.vmem %s3, %s795
      $region44: #{hw_upsampling.1} parent=39 // pred_fallthru
        _
    $region40: #{hw_upsampling.1} parent=5 // pred_fallthru
      _
  $region6: #{hw_upsampling.1} parent=0 // loop_footer
    %s13 = sadd.s32 1, %s9
  $region7: #{hw_upsampling.1} parent=0 // loop_footer_branch
    %8 = sbr.rel target = $region3
  $region8: #{hw_upsampling.1} parent=0 // loop_exit
    _

</llo_original>
